<compile_context>
chip_gen: v5e
topology: v5e:2x2
jax: 0.10.0
libtpu: 0.0.40
codegen_flags: <defaults>
</compile_context>

<pallas_src>
import functools

import jax
import jax.numpy as jnp
from jax.experimental import pallas as pl
from jax.experimental.pallas import tpu as pltpu

SUNRGBD_FRQ = [
    0.3829, 0.452448, 0.637584, 0.377464, 0.585595, 0.479574, 0.781544,
    0.982534, 1.017466, 0.624581, 2.589096, 0.980794, 0.92034, 0.667984,
    1.172291, 0.86224, 0.921714, 2.154782, 1.187832, 1.178115, 1.848545,
    1.428922, 2.849658, 0.771605, 1.656668, 4.483506, 2.209922, 1.12028,
    2.790182, 0.706519, 3.994768, 2.220004, 0.972934, 1.481525, 5.342475,
    0.750738, 4.040773,
]
NUM_CLASSES = len(SUNRGBD_FRQ)   # 37
MAX_TILE_PIX = 8192              # pixels (lanes) per grid step (review: 4096-8192)


def _cdiv(a, b):
    return -(-a // b)


def _num_tensorcores():
    """Best-effort TensorCore count: 1 on single-TC chips (v5e/v6e), else 2."""
    try:
        kind = jax.devices()[0].device_kind.lower()
    except Exception:
        return 2
    if "lite" in kind or "v5e" in kind or "v6e" in kind:
        return 1
    return 2


def _focal_loss_kernel(x_ref, t_ref, w_ref, acc_ref, *, hw, tile, tiles_per_core):
    # Grid = (core, batch_image, pixel_tile_within_core).
    core = pl.program_id(0)
    n = pl.program_id(1)
    tile_i = pl.program_id(2)

    # Zero this core's (2, tile) accumulator block on its first visit.
    @pl.when((n == 0) & (tile_i == 0))
    def _():
        acc_ref[...] = jnp.zeros_like(acc_ref)

    # Global (UNclamped) pixel offset of lane 0 of this tile: masks both the
    # ragged last tile and any clamped/duplicated tile of the last core.
    gtile = core * tiles_per_core + tile_i
    pix0 = gtile * tile

    # TODO(synk): keep this wide (C,T) chain in bf16 for bf16 logits on v6e/v7x.
    x = x_ref[...].astype(jnp.float32)               # (C, T) logits
    tgt = t_ref[...]                                 # (1, T) raw int targets

    lane = jax.lax.broadcasted_iota(jnp.int32, tgt.shape, 1)
    valid = (pix0 + lane) < hw                       # in-kernel tail mask
    mask = valid & (tgt > 0)                         # valid AND not "ignore"
    tgt_m = jnp.where(tgt > 0, tgt - 1, 0)           # shifted labels

    # Numerically stable log-sum-exp over the class (sublane) axis.
    m = jnp.max(x, axis=0, keepdims=True)                  # (1, T)
    s = jnp.sum(jnp.exp(x - m), axis=0, keepdims=True)     # (1, T)
    log_s = jnp.log(s)

    # One-hot gather of the target logit and the (pre-broadcast) class weight.
    cls = jax.lax.broadcasted_iota(jnp.int32, x.shape, 0)  # (C, T)
    onehot = cls == tgt_m
    x_t = jnp.sum(jnp.where(onehot, x, 0.0), axis=0, keepdims=True)         # (1, T)
    w_t = jnp.sum(jnp.where(onehot, w_ref[...], 0.0), axis=0, keepdims=True)

    # Focal term on the narrow (1, T) target column only.
    logp_t = (x_t - m) - log_s                       # log softmax at target
    p_t = jnp.exp(logp_t)                            # softmax at target
    loss_pix = -w_t * (1.0 - p_t) ** 2 * logp_t      # NLLLoss(weight, reduce=False)

    # Row 0: masked loss, row 1: valid-pixel count (single merged accumulator).
    acc_ref[...] += jnp.concatenate(
        [jnp.where(mask, loss_pix, 0.0), mask.astype(jnp.float32)], axis=0)


def _focal_loss_one_scale(x, t, w_f32, *, num_cores):
    """Masked loss-sum and valid-pixel count for one scale (NCHW logits)."""
    batch, c, h, w_sp = (int(d) for d in x.shape)
    assert c == NUM_CLASSES
    hw = h * w_sp

    # Lane-dense tile that never exceeds the pixel axis (the partial last tile
    # is masked in-kernel; no zero-pad / concatenate copies of the logits).
    tile = hw if hw < 128 else min(MAX_TILE_PIX, (hw // 128) * 128)
    n_tiles = _cdiv(hw, tile)
    tiles_per_core = _cdiv(n_tiles, num_cores)
    max_block = n_tiles - 1

    x3 = x.reshape(batch, c, hw)                         # free NCHW reshape
    t3 = t.reshape(batch, 1, hw).astype(jnp.int32)
    # Pre-broadcast class weights to (C, tile): resident, no per-step lane bcast.
    w_bcast = jnp.broadcast_to(w_f32.reshape(NUM_CLASSES, 1), (NUM_CLASSES, tile))

    def pix_map(cr, n, i):
        # Clamp so the DMA never walks off the pixel axis; the kernel's
        # (pix0 + lane) < hw mask zeroes any clamped/ragged contribution.
        return (n, 0, jnp.minimum(cr * tiles_per_core + i, max_block))

    kernel = functools.partial(_focal_loss_kernel, hw=hw, tile=tile,
                               tiles_per_core=tiles_per_core)

    acc = pl.pallas_call(
        kernel,
        out_shape=jax.ShapeDtypeStruct((num_cores, 2, tile), jnp.float32),
        grid_spec=pltpu.PrefetchScalarGridSpec(
            num_scalar_prefetch=0,
            grid=(num_cores, batch, tiles_per_core),
            in_specs=[
                # logits (N, C, HW): classes on sublanes, pixels on lanes
                pl.BlockSpec((None, NUM_CLASSES, tile), pix_map),
                # targets (N, 1, HW)
                pl.BlockSpec((None, 1, tile), pix_map),
                # class weights (C, tile): constant block, stays resident
                pl.BlockSpec((NUM_CLASSES, tile), lambda cr, n, i: (0, 0)),
            ],
            out_specs=pl.BlockSpec((None, 2, tile), lambda cr, n, i: (cr, 0, 0)),
        ),
        compiler_params=pltpu.CompilerParams(
            dimension_semantics=("parallel", "arbitrary", "arbitrary")),
    )(x3, t3, w_bcast)

    loss_sum = jnp.sum(acc[:, 0, :])
    cnt_sum = jnp.sum(acc[:, 1, :])
    return loss_sum, cnt_sum


def focal_loss_2d(inputs_scales, targets_scales, weight, num_cores=None):
    """Sum over scales of masked-mean focal loss (PyTorch FocalLoss2d.forward)."""
    assert len(inputs_scales) == len(targets_scales) >= 1
    if num_cores is None:
        num_cores = _num_tensorcores()
    w_f32 = jnp.asarray(weight, dtype=jnp.float32)
    assert int(w_f32.shape[0]) == NUM_CLASSES

    total = jnp.float32(0.0)
    for x, t in zip(inputs_scales, targets_scales):
        loss_sum, cnt_sum = _focal_loss_one_scale(x, t, w_f32, num_cores=num_cores)
        # Per-scale masked mean; cnt_sum == 0 yields NaN exactly like PyTorch.
        total = total + loss_sum / cnt_sum
    return total


def _reference_focal_loss_2d(inputs_scales, targets_scales, weight):
    """Pure-JAX reference matching the PyTorch module (verification only)."""
    total = jnp.float32(0.0)
    for logits, targets in zip(inputs_scales, targets_scales):
        mask = targets > 0
        tgt_m = jnp.where(mask, targets - 1, targets).astype(jnp.int32)
        p = jax.nn.softmax(logits, axis=1)
        logp = jax.nn.log_softmax(logits, axis=1)
        focal = (1.0 - p) ** 2 * logp                             # (N, C, H, W)
        gathered = jnp.take_along_axis(focal, tgt_m[:, None, :, :], axis=1)[:, 0]
        w_t = weight[tgt_m]
        loss_all = -w_t * gathered                                # NLLLoss(reduce=False)
        total = total + jnp.sum(jnp.where(mask, loss_all, 0.0)) / jnp.sum(
            mask.astype(jnp.float32))
    return total


if __name__ == "__main__":
    key = jax.random.PRNGKey(0)
    k1, k2, k3, k4, k5, k6 = jax.random.split(key, 6)

    weight = jnp.asarray(SUNRGBD_FRQ, dtype=jnp.float32)

    # Three scales (the PyTorch module takes lists of per-scale tensors);
    # sizes chosen to exercise multiple tiles, a ragged last tile, and a
    # sub-128-pixel scale.
    inputs_scales = [
        jax.random.normal(k1, (2, NUM_CLASSES, 16, 16), dtype=jnp.float32),
        jax.random.normal(k2, (2, NUM_CLASSES, 12, 12), dtype=jnp.float32),
        jax.random.normal(k3, (2, NUM_CLASSES, 8, 8), dtype=jnp.float32),
    ]
    # Targets in [0, NUM_CLASSES]; 0 means "ignore" in the original code.
    targets_scales = [
        jax.random.randint(k4, (2, 16, 16), 0, NUM_CLASSES + 1, dtype=jnp.int32),
        jax.random.randint(k5, (2, 12, 12), 0, NUM_CLASSES + 1, dtype=jnp.int32),
        jax.random.randint(k6, (2, 8, 8), 0, NUM_CLASSES + 1, dtype=jnp.int32),
    ]

    out = jax.block_until_ready(focal_loss_2d(inputs_scales, targets_scales, weight))
    ref = jax.block_until_ready(
        _reference_focal_loss_2d(inputs_scales, targets_scales, weight))

    assert jnp.allclose(out, ref, rtol=1e-4, atol=1e-4), (out, ref)
    print("KERNEL_OK")
</pallas_src>

<mosaic_0001>
module attributes {stable_mosaic.version = 11 : i64} {
  func.func @_focal_loss_kernel(%arg0: i32, %arg1: i32, %arg2: i32, %arg3: memref<1x37x256xf32, #tpu.memory_space<vmem>>, %arg4: memref<1x1x256xi32, #tpu.memory_space<vmem>>, %arg5: memref<37x256xf32, #tpu.memory_space<vmem>>, %arg6: memref<1x2x256xf32, #tpu.memory_space<vmem>>) attributes {dimension_semantics = [#tpu.dimension_semantics<parallel>, #tpu.dimension_semantics<arbitrary>, #tpu.dimension_semantics<arbitrary>], iteration_bounds = array<i64: 2, 2, 1>, scalar_prefetch = 0 : i64, scratch_operands = 0 : i64, tpu.core_type = #tpu.core_type<tc>, window_params = [{transform_indices = @transform_0, window_bounds = array<i64: 1, 37, 256>}, {transform_indices = @transform_1, window_bounds = array<i64: 1, 1, 256>}, {pipeline_mode = #tpu.pipeline_mode<synchronous>, transform_indices = @transform_2, window_bounds = array<i64: 37, 256>}, {transform_indices = @transform_3, window_bounds = array<i64: 1, 2, 256>}]} {
    %c0_i32 = arith.constant 0 : i32
    %0 = arith.cmpi eq, %arg1, %c0_i32 : i32
    %c0_i32_0 = arith.constant 0 : i32
    %1 = arith.cmpi eq, %arg2, %c0_i32_0 : i32
    %2 = arith.andi %0, %1 : i1
    %3 = arith.extui %2 : i1 to i32
    %c0_i32_1 = arith.constant 0 : i32
    %4 = arith.cmpi ne, %3, %c0_i32_1 : i32
    scf.if %4 {
      %cst_28 = arith.constant 0.000000e+00 : f32
      %67 = vector.broadcast %cst_28 : f32 to vector<2x256xf32>
      %c0_29 = arith.constant 0 : index
      %c0_30 = arith.constant 0 : index
      %c0_31 = arith.constant 0 : index
      %68 = vector.load %arg6[%c0_29, %c0_30, %c0_31] : memref<1x2x256xf32, #tpu.memory_space<vmem>>, vector<1x2x256xf32>
      %69 = vector.shape_cast %68 : vector<1x2x256xf32> to vector<2x256xf32>
      %70 = vector.shape_cast %67 : vector<2x256xf32> to vector<1x2x256xf32>
      tpu.vector_store %arg6[%c0_29, %c0_30, %c0_31], %70 {strides = array<i32>} : memref<1x2x256xf32, #tpu.memory_space<vmem>>, vector<1x2x256xf32>,
    } else {
    }
    %c1_i32 = arith.constant 1 : i32
    %5 = arith.muli %arg0, %c1_i32 : i32
    %6 = arith.addi %5, %arg2 : i32
    %c256_i32 = arith.constant 256 : i32
    %7 = arith.muli %6, %c256_i32 : i32
    %c0 = arith.constant 0 : index
    %c0_2 = arith.constant 0 : index
    %c0_3 = arith.constant 0 : index
    %8 = vector.load %arg3[%c0, %c0_2, %c0_3] : memref<1x37x256xf32, #tpu.memory_space<vmem>>, vector<1x37x256xf32>
    %9 = vector.shape_cast %8 : vector<1x37x256xf32> to vector<37x256xf32>
    %c0_4 = arith.constant 0 : index
    %c0_5 = arith.constant 0 : index
    %c0_6 = arith.constant 0 : index
    %10 = vector.load %arg4[%c0_4, %c0_5, %c0_6] : memref<1x1x256xi32, #tpu.memory_space<vmem>>, vector<1x1x256xi32>
    %11 = vector.shape_cast %10 : vector<1x1x256xi32> to vector<1x256xi32>
    %12 = tpu.iota {dimensions = array<i32: 1>} : vector<1x256xi32>
    %13 = vector.broadcast %7 : i32 to vector<1x256xi32>
    %14 = arith.addi %13, %12 : vector<1x256xi32>
    %c256_i32_7 = arith.constant 256 : i32
    %15 = vector.broadcast %c256_i32_7 : i32 to vector<1x256xi32>
    %16 = arith.cmpi slt, %14, %15 : vector<1x256xi32>
    %c0_i32_8 = arith.constant 0 : i32
    %17 = vector.broadcast %c0_i32_8 : i32 to vector<1x256xi32>
    %18 = arith.cmpi sgt, %11, %17 : vector<1x256xi32>
    %19 = arith.andi %16, %18 : vector<1x256xi1>
    %c0_i32_9 = arith.constant 0 : i32
    %20 = vector.broadcast %c0_i32_9 : i32 to vector<1x256xi32>
    %21 = arith.cmpi sgt, %11, %20 : vector<1x256xi32>
    %c1_i32_10 = arith.constant 1 : i32
    %22 = vector.broadcast %c1_i32_10 : i32 to vector<1x256xi32>
    %23 = arith.subi %11, %22 : vector<1x256xi32>
    %c0_i32_11 = arith.constant 0 : i32
    %24 = vector.broadcast %c0_i32_11 : i32 to vector<1x256xi32>
    %25 = arith.select %21, %23, %24 : vector<1x256xi1>, vector<1x256xi32>
    %cst = arith.constant dense<0xFF800000> : vector<256xf32>
    %26 = vector.multi_reduction <maximumf>, %9, %cst [0] : vector<37x256xf32> to vector<256xf32>
    %27 = vector.shape_cast %26 : vector<256xf32> to vector<1x256xf32>
    %28 = vector.broadcast %27 : vector<1x256xf32> to vector<37x256xf32>
    %29 = arith.subf %9, %28 : vector<37x256xf32>
    %30 = math.exp %29 : vector<37x256xf32>
    %cst_12 = arith.constant dense<0.000000e+00> : vector<256xf32>
    %31 = vector.multi_reduction <add>, %30, %cst_12 [0] : vector<37x256xf32> to vector<256xf32>
    %32 = vector.shape_cast %31 : vector<256xf32> to vector<1x256xf32>
    %33 = math.log %32 : vector<1x256xf32>
    %34 = tpu.iota {dimensions = array<i32: 0>} : vector<37x256xi32>
    %35 = vector.broadcast %25 : vector<1x256xi32> to vector<37x256xi32>
    %36 = arith.cmpi eq, %34, %35 : vector<37x256xi32>
    %cst_13 = arith.constant 0.000000e+00 : f32
    %37 = vector.broadcast %cst_13 : f32 to vector<37x256xf32>
    %38 = arith.select %36, %9, %37 : vector<37x256xi1>, vector<37x256xf32>
    %cst_14 = arith.constant dense<0.000000e+00> : vector<256xf32>
    %39 = vector.multi_reduction <add>, %38, %cst_14 [0] : vector<37x256xf32> to vector<256xf32>
    %40 = vector.shape_cast %39 : vector<256xf32> to vector<1x256xf32>
    %c0_15 = arith.constant 0 : index
    %c0_16 = arith.constant 0 : index
    %41 = vector.load %arg5[%c0_15, %c0_16] : memref<37x256xf32, #tpu.memory_space<vmem>>, vector<37x256xf32>
    %cst_17 = arith.constant 0.000000e+00 : f32
    %42 = vector.broadcast %cst_17 : f32 to vector<37x256xf32>
    %43 = arith.select %36, %41, %42 : vector<37x256xi1>, vector<37x256xf32>
    %cst_18 = arith.constant dense<0.000000e+00> : vector<256xf32>
    %44 = vector.multi_reduction <add>, %43, %cst_18 [0] : vector<37x256xf32> to vector<256xf32>
    %45 = vector.shape_cast %44 : vector<256xf32> to vector<1x256xf32>
    %46 = arith.subf %40, %27 : vector<1x256xf32>
    %47 = arith.subf %46, %33 : vector<1x256xf32>
    %48 = math.exp %47 : vector<1x256xf32>
    %cst_19 = arith.constant 0.000000e+00 : f32
    %49 = vector.broadcast %cst_19 : f32 to vector<1x256xf32>
    %50 = arith.subf %49, %45 : vector<1x256xf32>
    %cst_20 = arith.constant 1.000000e+00 : f32
    %51 = vector.broadcast %cst_20 : f32 to vector<1x256xf32>
    %52 = arith.subf %51, %48 : vector<1x256xf32>
    %53 = arith.mulf %52, %52 : vector<1x256xf32>
    %54 = arith.mulf %50, %53 : vector<1x256xf32>
    %55 = arith.mulf %54, %47 : vector<1x256xf32>
    %c0_21 = arith.constant 0 : index
    %c0_22 = arith.constant 0 : index
    %c0_23 = arith.constant 0 : index
    %56 = vector.load %arg6[%c0_21, %c0_22, %c0_23] : memref<1x2x256xf32, #tpu.memory_space<vmem>>, vector<1x2x256xf32>
    %57 = vector.shape_cast %56 : vector<1x2x256xf32> to vector<2x256xf32>
    %cst_24 = arith.constant 0.000000e+00 : f32
    %58 = vector.broadcast %cst_24 : f32 to vector<1x256xf32>
    %59 = arith.select %19, %55, %58 : vector<1x256xi1>, vector<1x256xf32>
    %60 = arith.extui %19 : vector<1x256xi1> to vector<1x256xi32>
    %61 = arith.sitofp %60 : vector<1x256xi32> to vector<1x256xf32>
    %62 = tpu.concatenate %59, %61 in 0 : vector<1x256xf32>, vector<1x256xf32> -> vector<2x256xf32>
    %63 = arith.addf %57, %62 : vector<2x256xf32>
    %c0_25 = arith.constant 0 : index
    %c0_26 = arith.constant 0 : index
    %c0_27 = arith.constant 0 : index
    %64 = vector.load %arg6[%c0_25, %c0_26, %c0_27] : memref<1x2x256xf32, #tpu.memory_space<vmem>>, vector<1x2x256xf32>
    %65 = vector.shape_cast %64 : vector<1x2x256xf32> to vector<2x256xf32>
    %66 = vector.shape_cast %63 : vector<2x256xf32> to vector<1x2x256xf32>
    tpu.vector_store %arg6[%c0_25, %c0_26, %c0_27], %66 {strides = array<i32>} : memref<1x2x256xf32, #tpu.memory_space<vmem>>, vector<1x2x256xf32>,
    return
  }
  func.func @transform_0(%arg0: i32, %arg1: i32, %arg2: i32) -> (i32, i32, i32) {
    %c1_i32 = arith.constant 1 : i32
    %0 = arith.muli %arg0, %c1_i32 : i32
    %1 = arith.addi %0, %arg2 : i32
    %c0_i32 = arith.constant 0 : i32
    %2 = arith.minsi %1, %c0_i32 : i32
    %c0_i32_0 = arith.constant 0 : i32
    %c0_i32_1 = arith.constant 0 : i32
    return %arg1, %c0_i32_0, %2 : i32, i32, i32
  }
  func.func @transform_1(%arg0: i32, %arg1: i32, %arg2: i32) -> (i32, i32, i32) {
    %c1_i32 = arith.constant 1 : i32
    %0 = arith.muli %arg0, %c1_i32 : i32
    %1 = arith.addi %0, %arg2 : i32
    %c0_i32 = arith.constant 0 : i32
    %2 = arith.minsi %1, %c0_i32 : i32
    %c0_i32_0 = arith.constant 0 : i32
    %c0_i32_1 = arith.constant 0 : i32
    return %arg1, %c0_i32_0, %2 : i32, i32, i32
  }
  func.func @transform_2(%arg0: i32, %arg1: i32, %arg2: i32) -> (i32, i32) {
    %c0_i32 = arith.constant 0 : i32
    %c0_i32_0 = arith.constant 0 : i32
    %c0_i32_1 = arith.constant 0 : i32
    return %c0_i32, %c0_i32_0 : i32, i32
  }
  func.func @transform_3(%arg0: i32, %arg1: i32, %arg2: i32) -> (i32, i32, i32) {
    %c0_i32 = arith.constant 0 : i32
    %c0_i32_0 = arith.constant 0 : i32
    %c0_i32_1 = arith.constant 0 : i32
    return %arg0, %c0_i32, %c0_i32_0 : i32, i32, i32
  }
}

</mosaic_0001>

<llo_original>
// kernel: tpu_custom_call.1
$region0: #{tpu_custom_call.1}
  #allocation0 [shape = 'u32[]', space=smem, size = 0x4, offset = 0x4, fixed_abs, tag = 'smem constant byte address 0x4 - core index']
  #allocation1 [shape = 'u32[72,128]{1,0:T(1,128)}', space=vmem, size = 0x9000, scoped, tag = 'internal scratch']
  %s0 = inlined_call_operand.vmem [shape: f32[2,37,256], index: 0, kind: input, shape index: {}]
  %s1 = inlined_call_operand.vmem [shape: s32[2,1,256], index: 1, kind: input, shape index: {}]
  %s2 = inlined_call_operand.vmem [shape: f32[37,256], index: 2, kind: input, shape index: {}]
  %s3 = inlined_call_operand.hbm [shape: f32[2,2,256], index: 3, kind: output, shape index: {}]
  %s4 = sld [smem:[#allocation0]]
  $region49: #{tpu_custom_call.1} parent=0
    _
  %s6 = ssub.s32 1, %s4
  %s7 = scalar_select 0, %s6, %s4
  $region1: #{tpu_custom_call.1} parent=0
    #allocation2 [shape = 'u8[4096]{0}', space=vmem, size = 0x1000, scoped, tag = 'output window, operand 0']
    #allocation3 [shape = 's32[2]{0}', space=sflag, size = 0x8, scoped, tag = 'scoped memory for tpu_custom_call.1']
    %8 = vsyncpa [#allocation3], 0
    %s9 = scalar_lea.sflag [#allocation3], 1
    %10 = vsyncpa %s9, 0
    loop: start=0, step=1, limit=6
    $region2: #{tpu_custom_call.1} parent=1 // loop_pre_header
      _
    $region3: #{tpu_custom_call.1} parent=1 // loop_header
      %s12 = sphi 0, %s16
      %p13 = scmp.ge.s32.totalorder %s12, 6
      %s19 = sphi 0, %s38
      %s20 = sphi 0, %s34
      %s21 = sphi 0, %s30
      %s22 = sphi 0, %s19
      %s23 = sphi 0, %s20
      %s24 = sphi 0, %s21
      %s25 = sphi 0, %s22
      %s26 = sphi 0, %s23
      %s27 = sphi 0, %s24
      %s49 = sphi 0, %s51
      %s52 = sphi 0, %s49
      %s53 = sphi 0, %s52
      %s69 = sphi 0, %s53
      %s83 = sphi 0, %s85
      %s86 = sphi 0, %s83
      %s87 = sphi 0, %s86
      %s103 = sphi 0, %s87
      %s107 = sphi 0, %s107
      %s109 = sphi 0, %s107
      %s110 = sphi 0, %s109
      %s124 = sphi 0, %s110
      %s130 = sphi 0, %s132
      %s133 = sphi 0, %s130
      %s134 = sphi 0, %s133
      %s150 = sphi 0, %s134
    $region4: #{tpu_custom_call.1} parent=1 // loop_header_branch
      %15 = sbr.rel (%p13) target = $region8
    $region5: #{tpu_custom_call.1} parent=1 // loop_body
      %s17 = ssub.s32 %s12, 1
      %s18 = ssub.s32 %s12, 2
      %s28 = sadd.s32 1, %s21
      %p29 = scmp.ge.s32.totalorder %s28, 1
      %s30 = scalar_select %p29, 0, %s28
      %s31 = sadd.s32 1, %s20
      %s32 = scalar_select %p29, %s31, %s20
      %p33 = scmp.ge.s32.totalorder %s32, 2
      %s34 = scalar_select %p33, 0, %s32
      %s35 = sadd.s32 1, %s19
      %s36 = scalar_select %p33, %s35, %s19
      %p37 = scmp.ge.s32.totalorder %s36, 2
      %s38 = scalar_select %p37, 0, %s36
      %s39 = sadd.s32 %s19, %s21
      %p40 = scmp.lt.s32.totalorder %s39, 0
      %s41 = scalar_select %p40, %s39, 0
      %s42 = sadd.s32 %s38, %s30
      %p43 = scmp.lt.s32.totalorder %s42, 0
      %s44 = scalar_select %p43, %s42, 0
      %s45 = ssub.s32 %s20, %s34
      %s46 = ssub.s32 %s41, %s44
      %s47 = sor.u32 %s45, %s46
      %p48 = scmp.eq.s32.totalorder %s47, 0
      %s50 = sadd.s32 %s49, 1
      %s51 = scalar_select %p48, %s49, %s50
      %p54 = pneg %p48
      %p55 = scmp.eq.s32.totalorder %s12, 3
      %p56 = por %p54, %p55
      %p57 = scmp.ne.s32.totalorder %s49, %s52
      %p58 = scmp.eq.s32.totalorder %s12, 0
      %p59 = por %p57, %p58
      %p60 = scmp.ne.s32.totalorder %s49, %s52
      %p61 = scmp.eq.s32.totalorder %s17, 3
      %p62 = por %p60, %p61
      %p63 = scmp.ne.s32.totalorder %s52, %s53
      %p64 = scmp.eq.s32.totalorder %s17, 0
      %p65 = por %p63, %p64
      %p66 = scmp.ne.s32.totalorder %s52, %s53
      %p67 = scmp.eq.s32.totalorder %s18, 3
      %p68 = por %p66, %p67
      %p70 = scmp.ne.s32.totalorder %s53, %s69
      %p71 = scmp.eq.s32.totalorder %s18, 0
      %p72 = por %p70, %p71
      %s73 = sadd.s32 %s19, %s21
      %p74 = scmp.lt.s32.totalorder %s73, 0
      %s75 = scalar_select %p74, %s73, 0
      %s76 = sadd.s32 %s38, %s30
      %p77 = scmp.lt.s32.totalorder %s76, 0
      %s78 = scalar_select %p77, %s76, 0
      %s79 = ssub.s32 %s20, %s34
      %s80 = ssub.s32 %s75, %s78
      %s81 = sor.u32 %s79, %s80
      %p82 = scmp.eq.s32.totalorder %s81, 0
      %s84 = sadd.s32 %s83, 1
      %s85 = scalar_select %p82, %s83, %s84
      %p88 = pneg %p82
      %p89 = scmp.eq.s32.totalorder %s12, 3
      %p90 = por %p88, %p89
      %p91 = scmp.ne.s32.totalorder %s83, %s86
      %p92 = scmp.eq.s32.totalorder %s12, 0
      %p93 = por %p91, %p92
      %p94 = scmp.ne.s32.totalorder %s83, %s86
      %p95 = scmp.eq.s32.totalorder %s17, 3
      %p96 = por %p94, %p95
      %p97 = scmp.ne.s32.totalorder %s86, %s87
      %p98 = scmp.eq.s32.totalorder %s17, 0
      %p99 = por %p97, %p98
      %p100 = scmp.ne.s32.totalorder %s86, %s87
      %p101 = scmp.eq.s32.totalorder %s18, 3
      %p102 = por %p100, %p101
      %p104 = scmp.ne.s32.totalorder %s87, %s103
      %p105 = scmp.eq.s32.totalorder %s18, 0
      %p106 = por %p104, %p105
      %s108 = sadd.s32 %s107, 1
      %p111 = scmp.eq.s32.totalorder %s12, 3
      %p112 = scmp.ne.s32.totalorder %s107, %s109
      %p113 = scmp.eq.s32.totalorder %s12, 0
      %p114 = por %p112, %p113
      %p115 = scmp.ne.s32.totalorder %s107, %s109
      %p116 = scmp.eq.s32.totalorder %s17, 3
      %p117 = por %p115, %p116
      %p118 = scmp.ne.s32.totalorder %s109, %s110
      %p119 = scmp.eq.s32.totalorder %s17, 0
      %p120 = por %p118, %p119
      %p121 = scmp.ne.s32.totalorder %s109, %s110
      %p122 = scmp.eq.s32.totalorder %s18, 3
      %p123 = por %p121, %p122
      %p125 = scmp.ne.s32.totalorder %s110, %s124
      %p126 = scmp.eq.s32.totalorder %s18, 0
      %p127 = por %p125, %p126
      %s128 = ssub.s32 %s19, %s38
      %p129 = scmp.eq.s32.totalorder %s128, 0
      %s131 = sadd.s32 %s130, 1
      %s132 = scalar_select %p129, %s130, %s131
      %p135 = pneg %p129
      %p136 = scmp.eq.s32.totalorder %s12, 3
      %p137 = por %p135, %p136
      %p138 = scmp.ne.s32.totalorder %s130, %s133
      %p139 = scmp.eq.s32.totalorder %s12, 0
      %p140 = por %p138, %p139
      %p141 = scmp.ne.s32.totalorder %s130, %s133
      %p142 = scmp.eq.s32.totalorder %s17, 3
      %p143 = por %p141, %p142
      %p144 = scmp.ne.s32.totalorder %s133, %s134
      %p145 = scmp.eq.s32.totalorder %s17, 0
      %p146 = por %p144, %p145
      %p147 = scmp.ne.s32.totalorder %s133, %s134
      %p148 = scmp.eq.s32.totalorder %s18, 3
      %p149 = por %p147, %p148
      %p151 = scmp.ne.s32.totalorder %s134, %s150
      %p152 = scmp.eq.s32.totalorder %s18, 0
      %p153 = por %p151, %p152
      %p154 = scmp.le.s32.totalorder 1, %s12
      %p155 = scmp.lt.s32.totalorder %s12, 5
      %p156 = pnand %p154, %p155
      %p157 = pneg %p156
      // Predicated region
      $region9: #{tpu_custom_call.1} parent=5 // pred_check
        _
      $region10: #{tpu_custom_call.1} parent=5 // pred_check_branch
        %159 = sbr.rel (%p156) target = $region12
      $region11: #{tpu_custom_call.1} parent=5 // pred_region
        %s160 = ssub.s32 %s12, 1
        // Predicated region
        $region13: #{tpu_custom_call.1} parent=11 // pred_check
          %p161 = pneg %p120
        $region14: #{tpu_custom_call.1} parent=11 // pred_check_branch
          %163 = sbr.rel (%p161) target = $region16
        $region15: #{tpu_custom_call.1} parent=11 // pred_region
          _
        $region16: #{tpu_custom_call.1} parent=11 // pred_fallthru
          _
      $region12: #{tpu_custom_call.1} parent=5 // pred_fallthru
        _
      %p164 = scmp.lt.s32.totalorder %s12, 4
      // Predicated region
      $region17: #{tpu_custom_call.1} parent=5 // pred_check
        %p165 = pneg %p164
      $region18: #{tpu_custom_call.1} parent=5 // pred_check_branch
        %167 = sbr.rel (%p165) target = $region20
      $region19: #{tpu_custom_call.1} parent=5 // pred_region
        // Predicated region
        $region21: #{tpu_custom_call.1} parent=19 // pred_check
          %p168 = pneg %p59
        $region22: #{tpu_custom_call.1} parent=19 // pred_check_branch
          %170 = sbr.rel (%p168) target = $region24
        $region23: #{tpu_custom_call.1} parent=19 // pred_region
          %s171 = sadd.s32 %s19, %s21
          %p172 = scmp.lt.s32.totalorder %s171, 0
          %s173 = scalar_select %p172, %s171, 0
          %s174 = smul.u32 2, %s173
          %p175 = scmp.lt.s32.totalorder %s20, 1
          %s176 = scalar_select %p175, %s20, 1
          %p177 = scmp.lt.s32.totalorder %s174, 1
          %s178 = scalar_select %p177, %s174, 1
          %s179 = smul.addr %s176, 10
          %s180 = sadd.s32 %s178, %s179
          %s181 = smul.addr %s180, 8
          %s182 = scalar_lea.vmem %s0, %s181
          %s183 = sadd.s32 %s19, %s21
          %p184 = scmp.lt.s32.totalorder %s183, 0
          %s185 = scalar_select %p184, %s183, 0
          %s186 = smul.u32 2, %s185
        $region24: #{tpu_custom_call.1} parent=19 // pred_fallthru
          _
        // Predicated region
        $region25: #{tpu_custom_call.1} parent=19 // pred_check
          %p187 = pneg %p93
        $region26: #{tpu_custom_call.1} parent=19 // pred_check_branch
          %189 = sbr.rel (%p187) target = $region28
        $region27: #{tpu_custom_call.1} parent=19 // pred_region
          %s190 = sadd.s32 %s19, %s21
          %p191 = scmp.lt.s32.totalorder %s190, 0
          %s192 = scalar_select %p191, %s190, 0
          %s193 = smul.u32 2, %s192
          %p194 = scmp.lt.s32.totalorder %s20, 1
          %s195 = scalar_select %p194, %s20, 1
          %p196 = scmp.lt.s32.totalorder %s193, 1
          %s197 = scalar_select %p196, %s193, 1
          %s198 = smul.addr %s195, 2
          %s199 = sadd.s32 %s197, %s198
          %s200 = scalar_lea.vmem %s1, %s199
          %s201 = sadd.s32 %s19, %s21
          %p202 = scmp.lt.s32.totalorder %s201, 0
          %s203 = scalar_select %p202, %s201, 0
          %s204 = smul.u32 2, %s203
        $region28: #{tpu_custom_call.1} parent=19 // pred_fallthru
          _
      $region20: #{tpu_custom_call.1} parent=5 // pred_fallthru
        _
      %p205 = scmp.le.s32.totalorder 1, %s12
      %p206 = scmp.lt.s32.totalorder %s12, 5
      %p207 = pnand %p205, %p206
      %p208 = pneg %p207
      // Predicated region
      $region29: #{tpu_custom_call.1} parent=5 // pred_check
        _
      $region30: #{tpu_custom_call.1} parent=5 // pred_check_branch
        %210 = sbr.rel (%p207) target = $region32
      $region31: #{tpu_custom_call.1} parent=5 // pred_region
        %s211 = ssub.s32 %s12, 1
        %s212 = sadd.s32 %s22, %s24
        %p213 = scmp.lt.s32.totalorder %s212, 0
        %s214 = scalar_select %p213, %s212, 0
        %s215 = smul.u32 2, %s214
        %p216 = scmp.lt.s32.totalorder %s23, 1
        %s217 = scalar_select %p216, %s23, 1
        %p218 = scmp.lt.s32.totalorder %s215, 1
        %s219 = scalar_select %p218, %s215, 1
        %s220 = smul.addr %s217, 10
        %s221 = sadd.s32 %s219, %s220
        %s222 = smul.addr %s221, 8
        %s223 = scalar_lea.vmem %s0, %s222
        %p224 = pneg %p65
        %p225 = pneg %p62
        %s226 = sadd.s32 %s22, %s24
        %p227 = scmp.lt.s32.totalorder %s226, 0
        %s228 = scalar_select %p227, %s226, 0
        %s229 = smul.u32 2, %s228
        %p230 = scmp.lt.s32.totalorder %s23, 1
        %s231 = scalar_select %p230, %s23, 1
        %p232 = scmp.lt.s32.totalorder %s229, 1
        %s233 = scalar_select %p232, %s229, 1
        %s234 = smul.addr %s231, 2
        %s235 = sadd.s32 %s233, %s234
        %s236 = scalar_lea.vmem %s1, %s235
        %p237 = pneg %p99
        %p238 = pneg %p96
        %p239 = pneg %p120
        %p240 = pneg %p117
        %p241 = pneg %p146
        %p242 = pneg %p143
        %s243 = sand.u32 %s133, 1
        %s244 = scalar_lea.sflag [#allocation3], %s243
        %s245 = sand.u32 %s133, 1
        %s246 = smul.addr %s245, 4
        %s247 = scalar_lea.vmem [#allocation2], %s246
        %s248 = sadd.s32 %s22, %s24
        %p249 = scmp.lt.s32.totalorder %s248, 0
        %s250 = scalar_select %p249, %s248, 0
        %s251 = smul.u32 2, %s250
        %p252 = scmp.lt.s32.totalorder %s23, 1
        %s253 = scalar_select %p252, %s23, 1
        %p254 = scmp.lt.s32.totalorder %s251, 1
        %s255 = scalar_select %p254, %s251, 1
        %s256 = smul.addr %s253, 10
        %s257 = sadd.s32 %s255, %s256
        %s258 = smul.addr %s257, 8
        %s259 = scalar_lea.vmem %s0, %s258
        %s260 = sadd.s32 %s22, %s24
        %p261 = scmp.lt.s32.totalorder %s260, 0
        %s262 = scalar_select %p261, %s260, 0
        %s263 = smul.u32 2, %s262
        %s264 = sadd.s32 %s22, %s24
        %p265 = scmp.lt.s32.totalorder %s264, 0
        %s266 = scalar_select %p265, %s264, 0
        %s267 = smul.u32 2, %s266
        %p268 = scmp.lt.s32.totalorder %s23, 1
        %s269 = scalar_select %p268, %s23, 1
        %p270 = scmp.lt.s32.totalorder %s267, 1
        %s271 = scalar_select %p270, %s267, 1
        %s272 = smul.addr %s269, 2
        %s273 = sadd.s32 %s271, %s272
        %s274 = scalar_lea.vmem %s1, %s273
        %s275 = sadd.s32 %s22, %s24
        %p276 = scmp.lt.s32.totalorder %s275, 0
        %s277 = scalar_select %p276, %s275, 0
        %s278 = smul.u32 2, %s277
        %p279 = scmp.eq.s32.totalorder %s23, 0
        %p280 = scmp.eq.s32.totalorder %s24, 0
        %p281 = pnand %p279, %p280
        %p282 = pneg %p281
        // Predicated region
        $region33: #{tpu_custom_call.1} parent=31 // pred_check
          _
        $region34: #{tpu_custom_call.1} parent=31 // pred_check_branch
          %284 = sbr.rel (%p281) target = $region36
        $region35: #{tpu_custom_call.1} parent=31 // pred_region
          %285 = vst [vmem:[%s247] sm:$0xf] 0.0
        $region36: #{tpu_custom_call.1} parent=31 // pred_fallthru
          _
        %s286 = sadd.s32 %s22, %s24
        %s287 = smul.u32 %s286, 256
        %v288 = vld [vmem:[%s259] sm:$0xff]
        %v289 = vld [vmem:[%s259 + $0x8] sm:$0xff]
        %v290 = vld [vmem:[%s259 + $0x10] sm:$0xff]
        %v291 = vld [vmem:[%s259 + $0x18] sm:$0xff]
        %v292 = vld [vmem:[%s259 + $0x20] sm:$0xff]
        %v293 = vld [vmem:[%s259 + $0x28] sm:$0xff]
        %v294 = vld [vmem:[%s259 + $0x30] sm:$0xff]
        %v295 = vld [vmem:[%s259 + $0x38] sm:$0xff]
        %v296 = vld [vmem:[%s259 + $0x40] sm:$0x1f]
        %v297 = vld [vmem:[%s259 + $0x48] sm:$0x1f]
        %v298 = vld [vmem:[%s274] sm:$0x3]
        %v299 = vlaneseq
        %v300 = vand.u32 %v299, 127
        %v301 = vadd.s32 %v300, 128
        %v302 = vstv %s287
        %v303 = vadd.s32 %v302, %v300
        %v304 = vadd.s32 %v302, %v301
        %vm305 = vcmp.lt.s32.totalorder %v303, 256
        %vm306 = vcmp.lt.s32.totalorder %v304, 256
        %vm307 = vcmp.gt.s32.totalorder %v298, 0
        %v308 = vsel %vm307, 1, 0
        %v309 = vperm.slane %v308, 0
        %v310 = vperm.slane %v308, 1
        %vm311 = vcmp.ne.s32.totalorder %v309, 0
        %vm312 = vcmp.ne.s32.totalorder %v310, 0
        %vm313 = vmand %vm305, %vm311
        %vm314 = vmand %vm306, %vm312
        %v315 = vsub.s32 %v298, 1
        %v316 = vsel %vm307, %v315, 0
        %v317 = vmax.f32 %v288, %v292
        %v318 = vmax.f32 %v290, %v294
        %vm319 = vcmask 1044480
        %v320 = vsel %vm319, %v296, -inf
        %v321 = vmax.f32 %v317, %v320
        %v322 = vmax.f32 %v321, %v318
        %v323 = vrot.slane %v322, 4
        %v324 = vmax.f32 %v322, %v323
        %v325 = vrot.slane %v324, 2
        %v326 = vmax.f32 %v324, %v325
        %v327 = vrot.slane %v326, 1
        %v328 = vmax.f32 %v326, %v327
        %v329 = vmax.f32 %v289, %v293
        %v330 = vmax.f32 %v291, %v295
        %v331 = vsel %vm319, %v297, -inf
        %v332 = vmax.f32 %v329, %v331
        %v333 = vmax.f32 %v332, %v330
        %v334 = vrot.slane %v333, 4
        %v335 = vmax.f32 %v333, %v334
        %v336 = vrot.slane %v335, 2
        %v337 = vmax.f32 %v335, %v336
        %v338 = vrot.slane %v337, 1
        %v339 = vmax.f32 %v337, %v338
        %v340 = vsub.f32 %v288, %v328
        %v341 = vsub.f32 %v289, %v339
        %v342 = vsub.f32 %v290, %v328
        %v343 = vsub.f32 %v291, %v339
        %v344 = vsub.f32 %v292, %v328
        %v345 = vsub.f32 %v293, %v339
        %v346 = vsub.f32 %v294, %v328
        %v347 = vsub.f32 %v295, %v339
        %v348 = vsub.f32 %v296, %v328
        %v349 = vsub.f32 %v297, %v339
        %v350 = vmul.f32 %v340, 1.442695
        %v351 = vpow.pop %v350
        %v352 = vmul.f32 %v341, 1.442695
        %v353 = vpow.pop %v352
        %v354 = vmul.f32 %v342, 1.442695
        %v355 = vpow.pop %v354
        %v356 = vmul.f32 %v343, 1.442695
        %v357 = vpow.pop %v356
        %v358 = vmul.f32 %v344, 1.442695
        %v359 = vpow.pop %v358
        %v360 = vmul.f32 %v345, 1.442695
        %v361 = vpow.pop %v360
        %v362 = vmul.f32 %v346, 1.442695
        %v363 = vpow.pop %v362
        %v364 = vmul.f32 %v347, 1.442695
        %v365 = vpow.pop %v364
        %v366 = vmul.f32 %v348, 1.442695
        %v367 = vpow.pop %v366
        %v368 = vmul.f32 %v349, 1.442695
        %v369 = vpow.pop %v368
        %v370 = vadd.f32 %v351, %v355
        %v371 = vadd.f32 %v370, %v359
        %v372 = vadd.f32 %v371, %v363
        %v373 = vsel %vm319, %v367, 0.0
        %v374 = vadd.f32 %v372, %v373
        %v375 = vrot.slane %v374, 4
        %v376 = vadd.f32 %v374, %v375
        %v377 = vrot.slane %v376, 2
        %v378 = vadd.f32 %v376, %v377
        %v379 = vrot.slane %v378, 1
        %v380 = vadd.f32 %v378, %v379
        %v381 = vadd.f32 %v353, %v357
        %v382 = vadd.f32 %v381, %v361
        %v383 = vadd.f32 %v382, %v365
        %v384 = vsel %vm319, %v369, 0.0
        %v385 = vadd.f32 %v383, %v384
        %v386 = vrot.slane %v385, 4
        %v387 = vadd.f32 %v385, %v386
        %v388 = vrot.slane %v387, 2
        %v389 = vadd.f32 %v387, %v388
        %v390 = vrot.slane %v389, 1
        %v391 = vadd.f32 %v389, %v390
        %v392 = vlog2.pop %v380
        %v393 = vmul.f32 %v392, 0.6931472
        %v394 = vlog2.pop %v391
        %v395 = vmul.f32 %v394, 0.6931472
        %v396 = vlaneseq
        %v397 = vshrl.u32 %v396, 7
        %v398 = vadd.s32 %v397, 8
        %v399 = vadd.s32 %v397, 16
        %v400 = vadd.s32 %v397, 24
        %v401 = vadd.s32 %v397, 32
        %v402 = vperm.slane %v316, 0
        %v403 = vperm.slane %v316, 1
        %vm404 = vcmp.eq.s32.totalorder %v397, %v402
        %vm405 = vcmp.eq.s32.totalorder %v397, %v403
        %vm406 = vcmp.eq.s32.totalorder %v398, %v402
        %vm407 = vcmp.eq.s32.totalorder %v398, %v403
        %vm408 = vcmp.eq.s32.totalorder %v399, %v402
        %vm409 = vcmp.eq.s32.totalorder %v399, %v403
        %vm410 = vcmp.eq.s32.totalorder %v400, %v402
        %vm411 = vcmp.eq.s32.totalorder %v400, %v403
        %vm412 = vcmp.eq.s32.totalorder %v401, %v402
        %vm413 = vcmp.eq.s32.totalorder %v401, %v403
        %v414 = vsel %vm404, %v288, 0.0
        %v415 = vsel %vm405, %v289, 0.0
        %v416 = vsel %vm406, %v290, 0.0
        %v417 = vsel %vm407, %v291, 0.0
        %v418 = vsel %vm408, %v292, 0.0
        %v419 = vsel %vm409, %v293, 0.0
        %v420 = vsel %vm410, %v294, 0.0
        %v421 = vsel %vm411, %v295, 0.0
        %v422 = vsel %vm412, %v296, 0.0
        %v423 = vsel %vm413, %v297, 0.0
        %v424 = vadd.f32 %v414, %v416
        %v425 = vadd.f32 %v424, %v418
        %v426 = vadd.f32 %v425, %v420
        %v427 = vsel %vm319, %v422, 0.0
        %v428 = vadd.f32 %v426, %v427
        %v429 = vrot.slane %v428, 4
        %v430 = vadd.f32 %v428, %v429
        %v431 = vrot.slane %v430, 2
        %v432 = vadd.f32 %v430, %v431
        %v433 = vrot.slane %v432, 1
        %v434 = vadd.f32 %v432, %v433
        %v435 = vadd.f32 %v415, %v417
        %v436 = vadd.f32 %v435, %v419
        %v437 = vadd.f32 %v436, %v421
        %v438 = vsel %vm319, %v423, 0.0
        %v439 = vadd.f32 %v437, %v438
        %v440 = vrot.slane %v439, 4
        %v441 = vadd.f32 %v439, %v440
        %v442 = vrot.slane %v441, 2
        %v443 = vadd.f32 %v441, %v442
        %v444 = vrot.slane %v443, 1
        %v445 = vadd.f32 %v443, %v444
        %v446 = vld [vmem:[%s2] sm:$0xff]
        %v447 = vld [vmem:[%s2 + $0x8] sm:$0xff]
        %v448 = vld [vmem:[%s2 + $0x10] sm:$0xff]
        %v449 = vld [vmem:[%s2 + $0x18] sm:$0xff]
        %v450 = vld [vmem:[%s2 + $0x20] sm:$0xff]
        %v451 = vld [vmem:[%s2 + $0x28] sm:$0xff]
        %v452 = vld [vmem:[%s2 + $0x30] sm:$0xff]
        %v453 = vld [vmem:[%s2 + $0x38] sm:$0xff]
        %v454 = vld [vmem:[%s2 + $0x40] sm:$0x1f]
        %v455 = vld [vmem:[%s2 + $0x48] sm:$0x1f]
        %v456 = vsel %vm404, %v446, 0.0
        %v457 = vsel %vm405, %v447, 0.0
        %v458 = vsel %vm406, %v448, 0.0
        %v459 = vsel %vm407, %v449, 0.0
        %v460 = vsel %vm408, %v450, 0.0
        %v461 = vsel %vm409, %v451, 0.0
        %v462 = vsel %vm410, %v452, 0.0
        %v463 = vsel %vm411, %v453, 0.0
        %v464 = vsel %vm412, %v454, 0.0
        %v465 = vsel %vm413, %v455, 0.0
        %v466 = vadd.f32 %v456, %v458
        %v467 = vadd.f32 %v466, %v460
        %v468 = vadd.f32 %v467, %v462
        %v469 = vsel %vm319, %v464, 0.0
        %v470 = vadd.f32 %v468, %v469
        %v471 = vrot.slane %v470, 4
        %v472 = vadd.f32 %v470, %v471
        %v473 = vrot.slane %v472, 2
        %v474 = vadd.f32 %v472, %v473
        %v475 = vrot.slane %v474, 1
        %v476 = vadd.f32 %v474, %v475
        %v477 = vadd.f32 %v457, %v459
        %v478 = vadd.f32 %v477, %v461
        %v479 = vadd.f32 %v478, %v463
        %v480 = vsel %vm319, %v465, 0.0
        %v481 = vadd.f32 %v479, %v480
        %v482 = vrot.slane %v481, 4
        %v483 = vadd.f32 %v481, %v482
        %v484 = vrot.slane %v483, 2
        %v485 = vadd.f32 %v483, %v484
        %v486 = vrot.slane %v485, 1
        %v487 = vadd.f32 %v485, %v486
        %v488 = vsub.f32 %v434, %v328
        %v489 = vsub.f32 %v445, %v339
        %v490 = vsub.f32 %v488, %v393
        %v491 = vsub.f32 %v489, %v395
        %v492 = vmul.f32 %v490, 1.442695
        %v493 = vpow.pop %v492
        %v494 = vmul.f32 %v491, 1.442695
        %v495 = vpow.pop %v494
        %v496 = vsub.f32 0.0, %v476
        %v497 = vsub.f32 0.0, %v487
        %v498 = vsub.f32 1.0, %v493
        %v499 = vsub.f32 1.0, %v495
        %v500 = vmul.f32 %v498, %v498
        %v501 = vmul.f32 %v499, %v499
        %v502 = vmul.f32 %v496, %v500
        %v503 = vmul.f32 %v497, %v501
        %v504 = vmul.f32 %v502, %v490
        %v505 = vmul.f32 %v503, %v491
        %v506 = vld [vmem:[%s247] sm:$0xf]
        %v507 = vsel %vm313, %v504, 0.0
        %v508 = vsel %vm314, %v505, 0.0
        %v509 = vsel %vm313, 1, 0
        %v510 = vsel %vm314, 1, 0
        %v511 = vcvt.s32.f32 %v509
        %v512 = vcvt.s32.f32 %v510
        %v515 = vrot.slane %v511, 7
        %v516 = vrot.slane %v512, 7
        %vm519 = vcmask 1040384
        %v520 = vsel %vm519, %v507, %v515
        %v521 = vsel %vm519, %v508, %v516
        %v524 = vrot.slane %v521, 6
        %vm525 = vcmask 1041408
        %v526 = vsel %vm525, %v520, %v524
        %v528 = vadd.f32 %v506, %v526
        %529 = vst [vmem:[%s247] sm:$0xf] %v528
        %s530 = sand.u32 %s133, 1
        %s531 = scalar_lea.sflag [#allocation3], %s530
        %s532 = sand.u32 %s133, 1
        %s533 = smul.addr %s532, 4
        %s534 = scalar_lea.vmem [#allocation2], %s533
        // Predicated region
        $region37: #{tpu_custom_call.1} parent=31 // pred_check
          %p535 = pneg %p143
        $region38: #{tpu_custom_call.1} parent=31 // pred_check_branch
          %537 = sbr.rel (%p535) target = $region40
        $region39: #{tpu_custom_call.1} parent=31 // pred_region
          %539 = vsyncadd %s531, 0
          %s540 = smul.addr %s22, 2
          %s541 = smul.addr %s540, 2
          %s542 = scalar_lea.hbm %s3, %s541
          %s544 = sshll.u32 %s534, 4
          %s545 = int_to_ptr.vmem [resolvable:$true] %s544
          %s546 = sshll.u32 %s542, 4
          %s547 = int_to_ptr.hbm [resolvable:$true] %s546
          %549 = dma.vmem_to_hbm [thread:$0]  %s545, 64, %s547, %s531
        $region40: #{tpu_custom_call.1} parent=31 // pred_fallthru
          _
      $region32: #{tpu_custom_call.1} parent=5 // pred_fallthru
        _
      %p550 = scmp.le.s32.totalorder 2, %s12
      // Predicated region
      $region41: #{tpu_custom_call.1} parent=5 // pred_check
        %p551 = pneg %p550
      $region42: #{tpu_custom_call.1} parent=5 // pred_check_branch
        %553 = sbr.rel (%p551) target = $region44
      $region43: #{tpu_custom_call.1} parent=5 // pred_region
        %s554 = ssub.s32 %s12, 2
        // Predicated region
        $region45: #{tpu_custom_call.1} parent=43 // pred_check
          %p555 = pneg %p149
        $region46: #{tpu_custom_call.1} parent=43 // pred_check_branch
          %557 = sbr.rel (%p555) target = $region48
        $region47: #{tpu_custom_call.1} parent=43 // pred_region
          %s558 = sand.u32 %s134, 1
          %s559 = scalar_lea.sflag [#allocation3], %s558
          %s560 = sand.u32 %s134, 1
          %s561 = smul.addr %s560, 4
          %s562 = scalar_lea.vmem [#allocation2], %s561
          %564 = dma.done %s559, 64
        $region48: #{tpu_custom_call.1} parent=43 // pred_fallthru
          _
      $region44: #{tpu_custom_call.1} parent=5 // pred_fallthru
        _
    $region6: #{tpu_custom_call.1} parent=1 // loop_footer
      %s16 = sadd.s32 1, %s12
    $region7: #{tpu_custom_call.1} parent=1 // loop_footer_branch
      %11 = sbr.rel target = $region3
    $region8: #{tpu_custom_call.1} parent=1 // loop_exit
      _
    %565 = vsyncpa [#allocation3], 1
    %s566 = scalar_lea.sflag [#allocation3], 1
    %567 = vsyncpa %s566, 1

</llo_original>
